<compile_context>
chip_gen: v7x
topology: tpu7x:2x2x1
jax: 0.10.0
libtpu: 0.0.40
codegen_flags: <defaults>
</compile_context>

<pallas_src>
import functools

import jax
import jax.numpy as jnp
from jax.experimental import pallas as pl
from jax.experimental.pallas import tpu as pltpu

GAMMA = 1.5
ALPHA = 0.25

_LANES = 128


def _sublane_granularity(dtype):
    # sublane packing granularity: f32 -> 8, bf16/f16 -> 16, int8/fp8 -> 32
    return {4: 8, 2: 16, 1: 32}.get(jnp.dtype(dtype).itemsize, 8)


def _chip_defaults():
    """(tile_rows, num_cores) tuned per TPU generation (perf review)."""
    try:
        kind = jax.devices()[0].device_kind.lower()
    except Exception:
        kind = ""
    if "v7" in kind:
        # EUP-bound: engage both TensorCores; 16 MiB of double-buffered input
        # stays well inside v7x's 64 MiB physical VMEM.
        return 8192, 2
    if "v6" in kind:
        # HBM-bound: 8192x128 f32 tiles (16 MiB double-buffered) amortize the
        # ~0.35us per-step pipeline overhead; fits the 32 MiB scoped default.
        return 8192, 1
    if "v5" in kind:
        # Stay under v5e's 16 MiB default scoped VMEM (8 MiB of input buffers).
        return 4096, 1
    return 4096, 1


def _focal_kernel(pred_ref, true_ref, out_ref, *, gamma, alpha,
                  tiles_per_core, mask_from_tile, full_rows, col_rem,
                  apply_mask):
    c = pl.program_id(0)                  # core axis ("parallel")
    i = pl.program_id(1)                  # reduction axis ("arbitrary")
    tile_idx = c * tiles_per_core + i     # logical tile index (DMA side may be clamped)

    # Output block index is constant along the reduction axis, so out_ref stays
    # resident in VMEM and acts as an (8,128) vector accumulator per core.
    @pl.when(i == 0)
    def _():
        out_ref[...] = jnp.zeros_like(out_ref)

    x = pred_ref[...].astype(jnp.float32)
    y = true_ref[...].astype(jnp.float32)

    # Numerically stable BCE-with-logits (reduction='none'):
    #   max(x, 0) - x*y + log1p(exp(-|x|))
    e = jnp.exp(-jnp.abs(x))                       # single EUP exp, reused below
    bce = jnp.maximum(x, 0.0) - x * y + jnp.log1p(e)

    # sigmoid rebuilt from e = exp(-|x|):  x>=0: 1/(1+e),  x<0: e/(1+e)
    sig = jnp.where(x >= 0.0, 1.0, e) * pl.reciprocal(1.0 + e, approx=True)

    # z = 1 - p_t (FMA-friendly); clamp >= 0 because the approximate reciprocal
    # can push sig slightly above 1.0 and z < 0 would give NaN from sqrt/pow.
    z = jnp.maximum(y + sig * (1.0 - 2.0 * y), 0.0)
    alpha_factor = (2.0 * alpha - 1.0) * y + (1.0 - alpha)

    if gamma == 1.5:
        modulating = z * jnp.sqrt(z)               # z**1.5 without exp/log
    elif gamma == 2.0:
        modulating = z * z
    elif gamma == 1.0:
        modulating = z
    else:
        modulating = jnp.power(z, gamma)           # general-gamma fallback

    loss = bce * alpha_factor * modulating
    tr, ln = loss.shape

    def _accumulate(v):
        # (tile_rows,128) -> (tile_rows//8, 8, 128), sum over axis 0:
        # pure vreg+vreg VPU adds; cross-lane reduce deferred to the wrapper.
        out_ref[...] += v.reshape(-1, 8, ln).sum(axis=0)

    if apply_mask:
        # Only tiles at / past mask_from_tile can contain pad, over-read
        # garbage or clamped-duplicate data; all earlier tiles are fully valid.
        @pl.when(tile_idx >= mask_from_tile)
        def _():
            ridx = jax.lax.broadcasted_iota(jnp.int32, (tr, ln), 0)
            cidx = jax.lax.broadcasted_iota(jnp.int32, (tr, ln), 1)
            grow = tile_idx * tr + ridx            # global row: no flat-index overflow
            valid = (grow < full_rows) | ((grow == full_rows) & (cidx < col_rem))
            _accumulate(jnp.where(valid, loss, 0.0))

        @pl.when(tile_idx < mask_from_tile)
        def _():
            _accumulate(loss)
    else:
        _accumulate(loss)


def focal_loss(pred, true, gamma=GAMMA, alpha=ALPHA, reduction="mean",
               *, tile_rows=None, num_cores=None):
    """FocalLoss(nn.BCEWithLogitsLoss())(pred, true) forward pass."""
    assert pred.shape == true.shape
    n_elems = int(pred.size)
    assert n_elems > 0
    if reduction not in ("mean", "sum"):
        # TODO(synk): reduction='none' (full-size elementwise output) is not kernelized.
        raise NotImplementedError("only 'mean' and 'sum' reductions are kernelized")

    default_rows, default_cores = _chip_defaults()
    tile_rows = default_rows if tile_rows is None else int(tile_rows)
    num_cores = default_cores if num_cores is None else int(num_cores)

    # Inputs stream in their original dtype (bf16 stays bf16 -> half the HBM
    # bytes) and are upcast to f32 in-kernel.  On HBM-bound v5e, have the
    # producer hand `true` (and optionally `pred`) already as bf16; casting
    # here would only add an extra HBM copy.
    pred_f = jnp.ravel(pred)
    true_f = jnp.ravel(true)

    # Pad only the sub-128-element remainder (rare, minimal pad needed for a
    # lane-dense (rows,128) view).  All other raggedness is handled by letting
    # the last block over-read + masking in-kernel -- no full-stream pad copy.
    rem = n_elems % _LANES
    if rem:
        pred_f = jnp.pad(pred_f, (0, _LANES - rem))
        true_f = jnp.pad(true_f, (0, _LANES - rem))
    rows = pred_f.size // _LANES

    sub = max(_sublane_granularity(pred_f.dtype),
              _sublane_granularity(true_f.dtype))
    tile_rows = min(tile_rows, pl.cdiv(rows, sub) * sub)

    pred2 = pred_f.reshape(rows, _LANES)
    true2 = true_f.reshape(rows, _LANES)

    real_tiles = pl.cdiv(rows, tile_rows)
    tiles_per_core = pl.cdiv(real_tiles, num_cores)
    num_logical_tiles = tiles_per_core * num_cores
    last_block = real_tiles - 1

    elems_per_tile = tile_rows * _LANES
    mask_from_tile = n_elems // elems_per_tile     # first tile that needs masking
    apply_mask = mask_from_tile < num_logical_tiles
    full_rows = n_elems // _LANES
    col_rem = n_elems % _LANES

    def idx_map(c, i):
        # Clamp logical tiles past the end (from the num_cores rounding) onto
        # the last real block; their contribution is fully masked in-kernel.
        return (jnp.minimum(c * tiles_per_core + i, last_block), 0)

    tile_spec = pl.BlockSpec((tile_rows, _LANES), idx_map)

    kernel = functools.partial(
        _focal_kernel, gamma=float(gamma), alpha=float(alpha),
        tiles_per_core=tiles_per_core, mask_from_tile=mask_from_tile,
        full_rows=full_rows, col_rem=col_rem, apply_mask=bool(apply_mask))

    # 2 input streams x 2 pipeline buffers of one block each, plus slack;
    # capped well under v7x's 64 MiB physical VMEM.  Default double buffering.
    in_bytes = 2 * tile_rows * _LANES * (pred2.dtype.itemsize +
                                         true2.dtype.itemsize)
    vmem_limit = int(min(max(in_bytes + (2 << 20), 16 << 20), 48 << 20))

    partials = pl.pallas_call(
        kernel,
        out_shape=jax.ShapeDtypeStruct((num_cores * 8, _LANES), jnp.float32),
        grid_spec=pltpu.PrefetchScalarGridSpec(
            num_scalar_prefetch=0,
            grid=(num_cores, tiles_per_core),
            in_specs=[tile_spec, tile_spec],
            out_specs=pl.BlockSpec((8, _LANES), lambda c, i: (c, 0)),
        ),
        compiler_params=pltpu.CompilerParams(
            # Leading axis shards across TensorCores on multi-TC chips (v7x);
            # it is size 1 (free) on v5e/v6e.
            dimension_semantics=("parallel", "arbitrary"),
            vmem_limit_bytes=vmem_limit),
    )(pred2, true2)

    total = jnp.sum(partials)          # tiny final cross-lane reduce (XLA)
    if reduction == "mean":
        return total / n_elems
    return total


def _focal_loss_ref(pred, true, gamma=GAMMA, alpha=ALPHA):
    x = pred.astype(jnp.float32)
    y = true.astype(jnp.float32)
    bce = jnp.maximum(x, 0.0) - x * y + jnp.log1p(jnp.exp(-jnp.abs(x)))
    p = jax.nn.sigmoid(x)
    p_t = y * p + (1.0 - y) * (1.0 - p)
    af = y * alpha + (1.0 - y) * (1.0 - alpha)
    mf = jnp.power(1.0 - p_t, gamma)
    return jnp.mean(bce * af * mf)


if __name__ == "__main__":
    key = jax.random.PRNGKey(0)
    k1, k2, k3, k4, k5, k6 = jax.random.split(key, 6)

    # 1) Typical YOLOv5 obj/cls-loss shape (element count a multiple of 128).
    shape = (2, 4, 16, 16)
    pred = jax.random.normal(k1, shape, dtype=jnp.float32) * 2.0
    true = (jax.random.uniform(k2, shape) > 0.7).astype(jnp.float32)
    out = jax.block_until_ready(focal_loss(pred, true))
    ref = _focal_loss_ref(pred, true)
    # tolerance relaxed slightly: sigmoid uses the approximate EUP reciprocal
    assert jnp.allclose(out, ref, rtol=2e-3, atol=1e-6), (out, ref)

    # 2) Ragged element count (exercises the sub-128 pad + masked last tile).
    shape2 = (3, 5, 7, 9)
    p2 = jax.random.normal(k3, shape2, dtype=jnp.float32) * 2.0
    t2 = (jax.random.uniform(k4, shape2) > 0.7).astype(jnp.float32)
    out2 = jax.block_until_ready(focal_loss(p2, t2))
    ref2 = _focal_loss_ref(p2, t2)
    assert jnp.allclose(out2, ref2, rtol=2e-3, atol=1e-6), (out2, ref2)

    # 3) Forced small tiles + 2-way core split with an odd tile count
    #    (exercises multi-step accumulation and the fully-out-of-range
    #    clamped+masked logical tile from the num_cores rounding).
    shape3 = (88, 128)
    p3 = jax.random.normal(k5, shape3, dtype=jnp.float32) * 2.0
    t3 = (jax.random.uniform(k6, shape3) > 0.7).astype(jnp.float32)
    out3 = jax.block_until_ready(focal_loss(p3, t3, tile_rows=8, num_cores=2))
    ref3 = _focal_loss_ref(p3, t3)
    assert jnp.allclose(out3, ref3, rtol=2e-3, atol=1e-6), (out3, ref3)

    print("KERNEL_OK")
</pallas_src>

<mosaic_0001>
module attributes {stable_mosaic.version = 11 : i64} {
  func.func @_focal_kernel(%arg0: i32, %arg1: i32, %arg2: memref<16x128xf32, #tpu.memory_space<vmem>>, %arg3: memref<16x128xf32, #tpu.memory_space<vmem>>, %arg4: memref<8x128xf32, #tpu.memory_space<vmem>>) attributes {dimension_semantics = [#tpu.dimension_semantics<parallel>, #tpu.dimension_semantics<arbitrary>], iteration_bounds = array<i64: 1, 1>, scalar_prefetch = 0 : i64, scratch_operands = 0 : i64, tpu.core_type = #tpu.core_type<tc>, window_params = [{transform_indices = @transform_0, window_bounds = array<i64: 16, 128>}, {transform_indices = @transform_1, window_bounds = array<i64: 16, 128>}, {transform_indices = @transform_2, window_bounds = array<i64: 8, 128>}]} {
    %c0_i32 = arith.constant 0 : i32
    %0 = arith.cmpi eq, %arg1, %c0_i32 : i32
    %1 = arith.extui %0 : i1 to i32
    %c0_i32_0 = arith.constant 0 : i32
    %2 = arith.cmpi ne, %1, %c0_i32_0 : i32
    scf.if %2 {
      %cst_18 = arith.constant 0.000000e+00 : f32
      %44 = vector.broadcast %cst_18 : f32 to vector<8x128xf32>
      %c0_19 = arith.constant 0 : index
      %c0_20 = arith.constant 0 : index
      %45 = vector.load %arg4[%c0_19, %c0_20] : memref<8x128xf32, #tpu.memory_space<vmem>>, vector<8x128xf32>
      tpu.vector_store %arg4[%c0_19, %c0_20], %44 {strides = array<i32>} : memref<8x128xf32, #tpu.memory_space<vmem>>, vector<8x128xf32>,
    } else {
    }
    %c0 = arith.constant 0 : index
    %c0_1 = arith.constant 0 : index
    %3 = vector.load %arg2[%c0, %c0_1] : memref<16x128xf32, #tpu.memory_space<vmem>>, vector<16x128xf32>
    %c0_2 = arith.constant 0 : index
    %c0_3 = arith.constant 0 : index
    %4 = vector.load %arg3[%c0_2, %c0_3] : memref<16x128xf32, #tpu.memory_space<vmem>>, vector<16x128xf32>
    %5 = math.absf %3 : vector<16x128xf32>
    %cst = arith.constant 0.000000e+00 : f32
    %6 = vector.broadcast %cst : f32 to vector<16x128xf32>
    %7 = arith.subf %6, %5 : vector<16x128xf32>
    %8 = math.exp %7 : vector<16x128xf32>
    %cst_4 = arith.constant 0.000000e+00 : f32
    %9 = vector.broadcast %cst_4 : f32 to vector<16x128xf32>
    %10 = arith.maximumf %3, %9 : vector<16x128xf32>
    %11 = arith.mulf %3, %4 : vector<16x128xf32>
    %12 = arith.subf %10, %11 : vector<16x128xf32>
    %13 = math.log1p %8 : vector<16x128xf32>
    %14 = arith.addf %12, %13 : vector<16x128xf32>
    %cst_5 = arith.constant 0.000000e+00 : f32
    %15 = vector.broadcast %cst_5 : f32 to vector<16x128xf32>
    %16 = arith.cmpf oge, %3, %15 : vector<16x128xf32>
    %cst_6 = arith.constant 1.000000e+00 : f32
    %17 = vector.broadcast %cst_6 : f32 to vector<16x128xf32>
    %18 = arith.select %16, %17, %8 : vector<16x128xi1>, vector<16x128xf32>
    %cst_7 = arith.constant 1.000000e+00 : f32
    %19 = vector.broadcast %cst_7 : f32 to vector<16x128xf32>
    %20 = arith.addf %19, %8 : vector<16x128xf32>
    %21 = tpu.reciprocal %20 {approx = true} : vector<16x128xf32> -> vector<16x128xf32>
    %22 = arith.mulf %18, %21 : vector<16x128xf32>
    %cst_8 = arith.constant 2.000000e+00 : f32
    %23 = vector.broadcast %cst_8 : f32 to vector<16x128xf32>
    %24 = arith.mulf %23, %4 : vector<16x128xf32>
    %cst_9 = arith.constant 1.000000e+00 : f32
    %25 = vector.broadcast %cst_9 : f32 to vector<16x128xf32>
    %26 = arith.subf %25, %24 : vector<16x128xf32>
    %27 = arith.mulf %22, %26 : vector<16x128xf32>
    %28 = arith.addf %4, %27 : vector<16x128xf32>
    %cst_10 = arith.constant 0.000000e+00 : f32
    %29 = vector.broadcast %cst_10 : f32 to vector<16x128xf32>
    %30 = arith.maximumf %28, %29 : vector<16x128xf32>
    %cst_11 = arith.constant -5.000000e-01 : f32
    %31 = vector.broadcast %cst_11 : f32 to vector<16x128xf32>
    %32 = arith.mulf %31, %4 : vector<16x128xf32>
    %cst_12 = arith.constant 7.500000e-01 : f32
    %33 = vector.broadcast %cst_12 : f32 to vector<16x128xf32>
    %34 = arith.addf %32, %33 : vector<16x128xf32>
    %35 = math.sqrt %30 : vector<16x128xf32>
    %36 = arith.mulf %30, %35 : vector<16x128xf32>
    %37 = arith.mulf %14, %34 : vector<16x128xf32>
    %38 = arith.mulf %37, %36 : vector<16x128xf32>
    %c0_13 = arith.constant 0 : index
    %c0_14 = arith.constant 0 : index
    %39 = vector.load %arg4[%c0_13, %c0_14] : memref<8x128xf32, #tpu.memory_space<vmem>>, vector<8x128xf32>
    %40 = vector.shape_cast %38 : vector<16x128xf32> to vector<2x8x128xf32>
    %cst_15 = arith.constant dense<0.000000e+00> : vector<8x128xf32>
    %41 = vector.multi_reduction <add>, %40, %cst_15 [0] : vector<2x8x128xf32> to vector<8x128xf32>
    %42 = arith.addf %39, %41 : vector<8x128xf32>
    %c0_16 = arith.constant 0 : index
    %c0_17 = arith.constant 0 : index
    %43 = vector.load %arg4[%c0_16, %c0_17] : memref<8x128xf32, #tpu.memory_space<vmem>>, vector<8x128xf32>
    tpu.vector_store %arg4[%c0_16, %c0_17], %42 {strides = array<i32>} : memref<8x128xf32, #tpu.memory_space<vmem>>, vector<8x128xf32>,
    return
  }
  func.func @transform_0(%arg0: i32, %arg1: i32) -> (i32, i32) {
    %c1_i32 = arith.constant 1 : i32
    %0 = arith.muli %arg0, %c1_i32 : i32
    %1 = arith.addi %0, %arg1 : i32
    %c0_i32 = arith.constant 0 : i32
    %2 = arith.minsi %1, %c0_i32 : i32
    %c0_i32_0 = arith.constant 0 : i32
    %c0_i32_1 = arith.constant 0 : i32
    return %2, %c0_i32_0 : i32, i32
  }
  func.func @transform_1(%arg0: i32, %arg1: i32) -> (i32, i32) {
    %c1_i32 = arith.constant 1 : i32
    %0 = arith.muli %arg0, %c1_i32 : i32
    %1 = arith.addi %0, %arg1 : i32
    %c0_i32 = arith.constant 0 : i32
    %2 = arith.minsi %1, %c0_i32 : i32
    %c0_i32_0 = arith.constant 0 : i32
    %c0_i32_1 = arith.constant 0 : i32
    return %2, %c0_i32_0 : i32, i32
  }
  func.func @transform_2(%arg0: i32, %arg1: i32) -> (i32, i32) {
    %c0_i32 = arith.constant 0 : i32
    %c0_i32_0 = arith.constant 0 : i32
    return %arg0, %c0_i32 : i32, i32
  }
}

</mosaic_0001>

<llo_original>
// kernel: tpu_custom_call.1
$region0: #{tpu_custom_call.1}
  #allocation0 [shape = 'u32[]', space=smem, size = 0x4, offset = 0x4, fixed_abs, tag = 'smem constant byte address 0x4 - core index']
  #allocation1 [shape = 'u32[144,128]{1,0:T(1,128)}', space=vmem, size = 0x12000, scoped, tag = 'internal scratch']
  %s0 = inlined_call_operand.hbm [shape: f32[16,128], index: 0, kind: input, shape index: {}]
  %s1 = inlined_call_operand.hbm [shape: f32[16,128], index: 1, kind: input, shape index: {}]
  %s2 = inlined_call_operand.hbm [shape: f32[8,128], index: 2, kind: output, shape index: {}]
  %s3 = sld [smem:[#allocation0]]
  $region30: #{tpu_custom_call.1} parent=0
    _
  %s5 = ssub.s32 1, %s3
  %s6 = scalar_select 0, %s5, %s3
  $region1: #{tpu_custom_call.1} parent=0
    #allocation2 [shape = 'u8[8192]{0}', space=vmem, size = 0x2000, scoped, tag = 'input window, operand 0, single buffered']
    #allocation3 [shape = 's32[1]{0}', space=sflag, size = 0x4, scoped, tag = 'scoped memory for tpu_custom_call.1']
    #allocation4 [shape = 's32[1]{0}', space=sflag, size = 0x4, scoped, tag = 'scoped memory for tpu_custom_call.1']
    #allocation5 [shape = 'u8[8192]{0}', space=vmem, size = 0x2000, scoped, tag = 'input window, operand 1, single buffered']
    #allocation6 [shape = 's32[1]{0}', space=sflag, size = 0x4, scoped, tag = 'scoped memory for tpu_custom_call.1']
    #allocation7 [shape = 'u8[4096]{0}', space=vmem, size = 0x1000, scoped, tag = 'output window, operand 0, single buffered']
    %7 = vsyncpa [#allocation3], 0
    %8 = vsyncpa [#allocation6], 0
    %9 = vsyncpa [#allocation4], 0
    // Predicated region
    $region2: #{tpu_custom_call.1} parent=1 // pred_check
      _
    $region3: #{tpu_custom_call.1} parent=1 // pred_check_branch
      %11 = sbr.rel (0) target = $region5
    $region4: #{tpu_custom_call.1} parent=1 // pred_region
      %s12 = sadd.s32 0, 0
      %p13 = scmp.lt.s32.totalorder %s12, 0
      %s14 = scalar_select %p13, %s12, 0
      %s15 = smul.u32 2, %s14
      %s17 = ssub.s32 256, 256
      %18 = vsyncadd [#allocation3], %s17
      %s19 = smul.addr %s15, 128
      %s20 = scalar_lea.hbm %s0, %s19
      %s21 = sshll.u32 [#allocation2], 4
      %s22 = int_to_ptr.vmem [resolvable:$true] %s21
      %27 = dma.hbm_to_vmem [thread:$0]  %s20, 256, %s22, [#allocation3], 128, 128, 8
    $region5: #{tpu_custom_call.1} parent=1 // pred_fallthru
      _
    // Predicated region
    $region6: #{tpu_custom_call.1} parent=1 // pred_check
      _
    $region7: #{tpu_custom_call.1} parent=1 // pred_check_branch
      %29 = sbr.rel (0) target = $region9
    $region8: #{tpu_custom_call.1} parent=1 // pred_region
      %s30 = sadd.s32 0, 0
      %p31 = scmp.lt.s32.totalorder %s30, 0
      %s32 = scalar_select %p31, %s30, 0
      %s33 = smul.u32 2, %s32
      %s35 = ssub.s32 256, 256
      %36 = vsyncadd [#allocation6], %s35
      %s37 = smul.addr %s33, 128
      %s38 = scalar_lea.hbm %s1, %s37
      %s39 = sshll.u32 [#allocation5], 4
      %s40 = int_to_ptr.vmem [resolvable:$true] %s39
      %45 = dma.hbm_to_vmem [thread:$0]  %s38, 256, %s40, [#allocation6], 128, 128, 8
    $region9: #{tpu_custom_call.1} parent=1 // pred_fallthru
      _
    // Predicated region
    $region10: #{tpu_custom_call.1} parent=1 // pred_check
      _
    $region11: #{tpu_custom_call.1} parent=1 // pred_check_branch
      %47 = sbr.rel (0) target = $region13
    $region12: #{tpu_custom_call.1} parent=1 // pred_region
      %48 = dma.done [#allocation3], 256
    $region13: #{tpu_custom_call.1} parent=1 // pred_fallthru
      _
    // Predicated region
    $region14: #{tpu_custom_call.1} parent=1 // pred_check
      _
    $region15: #{tpu_custom_call.1} parent=1 // pred_check_branch
      %50 = sbr.rel (0) target = $region17
    $region16: #{tpu_custom_call.1} parent=1 // pred_region
      %51 = dma.done [#allocation6], 256
    $region17: #{tpu_custom_call.1} parent=1 // pred_fallthru
      _
    %s52 = sadd.s32 0, 0
    %p53 = scmp.lt.s32.totalorder %s52, 0
    %s54 = scalar_select %p53, %s52, 0
    %s55 = smul.u32 2, %s54
    %s56 = sadd.s32 0, 0
    %p57 = scmp.lt.s32.totalorder %s56, 0
    %s58 = scalar_select %p57, %s56, 0
    %s59 = smul.u32 2, %s58
    %p60 = scmp.eq.s32.totalorder 0, 0
    // Predicated region
    $region18: #{tpu_custom_call.1} parent=1 // pred_check
      %p61 = pneg %p60
    $region19: #{tpu_custom_call.1} parent=1 // pred_check_branch
      %63 = sbr.rel (%p61) target = $region21
    $region20: #{tpu_custom_call.1} parent=1 // pred_region
      %64 = vst [vmem:[#allocation7] sm:$0xff] 0.0
    $region21: #{tpu_custom_call.1} parent=1 // pred_fallthru
      _
    %v65 = vld [vmem:[#allocation2] sm:$0xff]
    %v66 = vld [vmem:[#allocation2 + $0x8] sm:$0xff]
    %v67 = vld [vmem:[#allocation5] sm:$0xff]
    %v68 = vld [vmem:[#allocation5 + $0x8] sm:$0xff]
    %v69 = vand.u32 2147483647, %v65
    %v70 = vand.u32 2147483647, %v66
    %v71 = vsub.f32 0.0, %v69
    %v72 = vsub.f32 0.0, %v70
    %v73 = vmul.f32 %v71, 1.442695
    %v74 = vpow.pop %v73
    %v75 = vmul.f32 %v72, 1.442695
    %v76 = vpow.pop %v75
    %v77 = vmax.f32 %v65, 0.0
    %v78 = vmax.f32 %v66, 0.0
    %v79 = vmul.f32 %v65, %v67
    %v80 = vmul.f32 %v66, %v68
    %v81 = vsub.f32 %v77, %v79
    %v82 = vsub.f32 %v78, %v80
    %v83 = vadd.f32 %v74, 1.0
    %v84 = vlog2.pop %v83
    %v85 = vmul.f32 %v84, 0.6931472
    %v86 = vmul.f32 -0.5, %v74
    %v87 = vadd.f32 %v86, 1.0
    %v88 = vmul.f32 %v87, %v74
    %v89 = vand.u32 2147483647, %v74
    %vm90 = vcmp.lt.f32.partialorder %v89, 0.0004427343
    %v91 = vsel %vm90, %v88, %v85
    %v92 = vadd.f32 %v76, 1.0
    %v93 = vlog2.pop %v92
    %v94 = vmul.f32 %v93, 0.6931472
    %v95 = vmul.f32 -0.5, %v76
    %v96 = vadd.f32 %v95, 1.0
    %v97 = vmul.f32 %v96, %v76
    %v98 = vand.u32 2147483647, %v76
    %vm99 = vcmp.lt.f32.partialorder %v98, 0.0004427343
    %v100 = vsel %vm99, %v97, %v94
    %v101 = vadd.f32 %v81, %v91
    %v102 = vadd.f32 %v82, %v100
    %vm103 = vcmp.ge.f32.partialorder %v65, 0.0
    %vm104 = vcmp.ge.f32.partialorder %v66, 0.0
    %v105 = vsel %vm103, 1.0, %v74
    %v106 = vsel %vm104, 1.0, %v76
    %v107 = vadd.f32 %v74, 1.0
    %v108 = vadd.f32 %v76, 1.0
    %v109 = vrcp.pop %v107
    %v110 = vrcp.pop %v108
    %v111 = vmul.f32 %v105, %v109
    %v112 = vmul.f32 %v106, %v110
    %v113 = vmul.f32 %v67, 2.0
    %v114 = vmul.f32 %v68, 2.0
    %v115 = vsub.f32 1.0, %v113
    %v116 = vsub.f32 1.0, %v114
    %v117 = vmul.f32 %v111, %v115
    %v118 = vmul.f32 %v112, %v116
    %v119 = vadd.f32 %v67, %v117
    %v120 = vadd.f32 %v68, %v118
    %v121 = vmax.f32 %v119, 0.0
    %v122 = vmax.f32 %v120, 0.0
    %v123 = vmul.f32 %v67, -0.5
    %v124 = vmul.f32 %v68, -0.5
    %v125 = vadd.f32 %v123, 0.75
    %v126 = vadd.f32 %v124, 0.75
    %v127 = vrsqrt.pop %v121
    %v128 = vmul.f32 %v121, %v127
    %vm129 = vcmp.eq.f32.partialorder %v121, inf
    %v130 = vsel %vm129, %v121, %v128
    %vm131 = vcmp.eq.f32.partialorder %v121, 0.0
    %v132 = vand.u32 %v121, 2147483648
    %v133 = vsel %vm131, %v132, %v130
    %v134 = vrsqrt.pop %v122
    %v135 = vmul.f32 %v122, %v134
    %vm136 = vcmp.eq.f32.partialorder %v122, inf
    %v137 = vsel %vm136, %v122, %v135
    %vm138 = vcmp.eq.f32.partialorder %v122, 0.0
    %v139 = vand.u32 %v122, 2147483648
    %v140 = vsel %vm138, %v139, %v137
    %v141 = vmul.f32 %v121, %v133
    %v142 = vmul.f32 %v122, %v140
    %v143 = vmul.f32 %v101, %v125
    %v144 = vmul.f32 %v102, %v126
    %v145 = vmul.f32 %v143, %v141
    %v146 = vmul.f32 %v144, %v142
    %v147 = vld [vmem:[#allocation7] sm:$0xff]
    %v148 = vadd.f32 %v145, %v146
    %v149 = vadd.f32 %v147, %v148
    %150 = vst [vmem:[#allocation7] sm:$0xff] %v149
    // Predicated region
    $region22: #{tpu_custom_call.1} parent=1 // pred_check
      _
    $region23: #{tpu_custom_call.1} parent=1 // pred_check_branch
      %152 = sbr.rel (0) target = $region25
    $region24: #{tpu_custom_call.1} parent=1 // pred_region
      %s154 = ssub.s32 128, 128
      %155 = vsyncadd [#allocation4], %s154
      %s157 = sshll.u32 [#allocation7], 4
      %s158 = int_to_ptr.vmem [resolvable:$true] %s157
      %160 = dma.vmem_to_hbm [thread:$0]  %s158, 128, %s2, [#allocation4]
    $region25: #{tpu_custom_call.1} parent=1 // pred_fallthru
      _
    // Predicated region
    $region26: #{tpu_custom_call.1} parent=1 // pred_check
      _
    $region27: #{tpu_custom_call.1} parent=1 // pred_check_branch
      %162 = sbr.rel (0) target = $region29
    $region28: #{tpu_custom_call.1} parent=1 // pred_region
      %163 = dma.done [#allocation4], 128
    $region29: #{tpu_custom_call.1} parent=1 // pred_fallthru
      _
    %164 = vsyncpa [#allocation3], 1
    %165 = vsyncpa [#allocation6], 1
    %166 = vsyncpa [#allocation4], 1

</llo_original>
